<compile_context>
chip_gen: v5e
topology: v5e:2x2
jax: 0.10.0
libtpu: 0.0.40
codegen_flags: <defaults>
</compile_context>

<pallas_src>
import jax
import jax.numpy as jnp
from jax import lax
from jax.experimental import pallas as pl
from jax.experimental.pallas import tpu as pltpu

_LANE = 128


def _round_up(x, m):
    return ((x + m - 1) // m) * m


def _pad_lane(n):
    return _round_up(max(int(n), 1), _LANE)


def _vmem_capacity_bytes():
    """Per-generation physical VMEM capacity, with a v7x-safe fallback."""
    try:
        cap = int(pltpu.get_tpu_info().vmem_capacity_bytes)
        if cap > 0:
            return cap
    except Exception:
        pass
    return 64 * 1024 * 1024  # conservative fallback (v7x per-TC size)


def _pick_batch_tile(B, d1, d2, d3, d4, vmem_budget):
    """Largest batch tile whose *padded* VMEM footprint fits the budget.

    Accounts for 128-lane padding of the narrow (16/32-wide) tiles, for f32
    intermediates, and for the f32 double-buffered lane-dense output tile.
    """
    # Per-batch-row VMEM bytes inside one grid step.
    bytes_per_row = (
        2 * _pad_lane(d1) * 4          # x1 tile (f32, double-buffered)
        + 2 * _pad_lane(d2) * 4        # x2 tile (f32, double-buffered)
        + 2 * _round_up(d4, 8) * 4     # out tile [d4, tb] (f32, 2 bufs, lane-dense)
        + _pad_lane(d1) * 2 + _pad_lane(d2) * 2   # in-kernel bf16 casts of x1/x2
        + _pad_lane(d3) * 4            # h (f32)
        + _pad_lane(d3) * 2            # h cast to bf16 for fc2
    )
    # Resident weights / biases (tiny; x2 for worst-case double buffering).
    weight_bytes = 2 * (
        _round_up(d1, 8) * _pad_lane(d3) * 2      # w1a (bf16)
        + _round_up(d2, 8) * _pad_lane(d3) * 2    # w1b (bf16)
        + _round_up(d4, 8) * _pad_lane(d3) * 2    # w2^T (bf16)
        + 8 * _pad_lane(d3) * 4                   # b1 (f32, [1, d3])
        + _round_up(d4, 8) * _pad_lane(1) * 4     # b2 (f32, [d4, 1])
    )
    avail = max(vmem_budget - weight_bytes, 1 << 20)
    tb_max = max((avail // bytes_per_row) // 512 * 512, 512)

    if B <= tb_max:
        if B > 1024:
            # Split into 2 grid steps so both of v7x's TensorCores get work.
            return min(tb_max, _round_up(pl.cdiv(B, 2), 512))
        return B  # single full-array block (always a legal block shape)
    # Large B: biggest tile that fits while keeping >= 2 balanced grid steps.
    return min(tb_max, _round_up(pl.cdiv(B, 2), 512))


def merge_layer_kernel(x1_ref, x2_ref, w1a_ref, w1b_ref, b1_ref,
                       w2t_ref, b2_ref, out_ref):
    # fc1 as split-K over the (implicit) concat: bf16 at the MXU boundary,
    # f32 accumulation.  The extra MXU push is free (K, N <= 32: huge slack).
    h = jnp.dot(x1_ref[...].astype(jnp.bfloat16), w1a_ref[...],
                preferred_element_type=jnp.float32)
    h = h + jnp.dot(x2_ref[...].astype(jnp.bfloat16), w1b_ref[...],
                    preferred_element_type=jnp.float32)
    # Bias + ReLU in f32 on the VPU (v5e has no bf16 VALU path).
    h = jnp.maximum(h + b1_ref[...], 0.0)
    # fc2 computed transposed so the output is lane-dense over the batch:
    # out_T[d4, tb] = w2^T[d4, d3] . h^T[d3, tb]  (contract last dims).
    out_t = lax.dot_general(
        w2t_ref[...], h.astype(jnp.bfloat16),
        dimension_numbers=(((1,), (1,)), ((), ())),
        preferred_element_type=jnp.float32)
    out_ref[...] = (out_t + b2_ref[...]).astype(out_ref.dtype)


def merge_layer(x1, x2, w1, b1, w2, b2, *, out_dtype=None):
    """Forward of MergeLayer.

    x1: [B, d1], x2: [B, d2]
    w1: [d1+d2, d3]  (pre-transposed so the math is x @ w1)
    b1: [d3]
    w2: [d3, d4]     (pre-transposed so the math is h @ w2)
    b2: [d4]
    Returns [B, d4] (f32 by default).  bf16 is used only at MXU operand
    boundaries; accumulation and the bias/ReLU epilogue stay in f32.
    """
    B, d1 = x1.shape
    _, d2 = x2.shape
    d_in, d3 = w1.shape
    d4 = w2.shape[1]
    assert d_in == d1 + d2
    out_dtype = out_dtype or x1.dtype

    # Tiny one-time weight preps: split fc1 weight along K so the concat never
    # materializes; pre-transpose fc2 weight; bf16 at MXU boundary.
    w1a = w1[:d1].astype(jnp.bfloat16)          # [d1, d3]
    w1b = w1[d1:].astype(jnp.bfloat16)          # [d2, d3]
    w2t = w2.T.astype(jnp.bfloat16)             # [d4, d3]
    b1_2d = b1.reshape(1, d3).astype(jnp.float32)
    b2_2d = b2.reshape(d4, 1).astype(jnp.float32)

    vmem_cap = _vmem_capacity_bytes()
    tile_budget = int(vmem_cap * 0.6)                       # for tile sizing
    vmem_limit = min(int(vmem_cap * 0.85), vmem_cap - (2 << 20))
    tb = _pick_batch_tile(B, d1, d2, d3, d4, tile_budget)
    grid = (pl.cdiv(B, tb),)

    def resident(shape):
        # Same block for every grid step -> stays VMEM-resident.
        return pl.BlockSpec(shape, lambda i: (0, 0))

    out_t = pl.pallas_call(
        merge_layer_kernel,
        out_shape=jax.ShapeDtypeStruct((d4, B), out_dtype),
        grid_spec=pltpu.PrefetchScalarGridSpec(
            num_scalar_prefetch=0,
            grid=grid,
            in_specs=[
                pl.BlockSpec((tb, d1), lambda i: (i, 0)),   # x1 batch tile
                pl.BlockSpec((tb, d2), lambda i: (i, 0)),   # x2 batch tile
                resident((d1, d3)),                         # fc1 weight (x1 half)
                resident((d2, d3)),                         # fc1 weight (x2 half)
                resident((1, d3)),                          # fc1 bias
                resident((d4, d3)),                         # fc2 weight (transposed)
                resident((d4, 1)),                          # fc2 bias
            ],
            out_specs=pl.BlockSpec((d4, tb), lambda i: (0, i)),  # lane-dense [d4, B]
        ),
        compiler_params=pltpu.CompilerParams(
            dimension_semantics=("parallel",),   # megacore sharding on v7x
            vmem_limit_bytes=vmem_limit,
        ),
    )(x1, x2, w1a, w1b, b1_2d, w2t, b2_2d)

    # TODO(synk): downstream consumers should take the [d4, B] layout directly
    # (or many MergeLayer heads should be packed so the output width >= 128);
    # the wrapper transpose below exists only to preserve the module's [B, d4]
    # return shape.
    return out_t.T


def xavier_normal(key, fan_out, fan_in, dtype=jnp.float32):
    std = (2.0 / (fan_in + fan_out)) ** 0.5
    return std * jax.random.normal(key, (fan_out, fan_in), dtype=dtype)


if __name__ == "__main__":
    # Small shapes consistent with the module: dim1=16, dim2=16, dim3=32, dim4=8
    B, dim1, dim2, dim3, dim4 = 8, 16, 16, 32, 8

    key = jax.random.PRNGKey(0)
    k_x1, k_x2, k_w1, k_b1, k_w2, k_b2 = jax.random.split(key, 6)

    x1 = jax.random.normal(k_x1, (B, dim1), dtype=jnp.float32)
    x2 = jax.random.normal(k_x2, (B, dim2), dtype=jnp.float32)

    # fc1: Linear(dim1+dim2 -> dim3), fc2: Linear(dim3 -> dim4).
    # PyTorch stores weight as [out, in]; xavier_normal_ applied to them.
    w1_torch = xavier_normal(k_w1, dim3, dim1 + dim2)   # [dim3, dim1+dim2]
    w2_torch = xavier_normal(k_w2, dim4, dim3)          # [dim4, dim3]
    # Bias: PyTorch default is U(-1/sqrt(fan_in), 1/sqrt(fan_in)).
    b1 = jax.random.uniform(k_b1, (dim3,), jnp.float32,
                            -1.0 / (dim1 + dim2) ** 0.5, 1.0 / (dim1 + dim2) ** 0.5)
    b2 = jax.random.uniform(k_b2, (dim4,), jnp.float32,
                            -1.0 / dim3 ** 0.5, 1.0 / dim3 ** 0.5)

    # Pre-transpose to [in, out] for the kernel's x @ W layout.
    w1 = w1_torch.T
    w2 = w2_torch.T

    out = merge_layer(x1, x2, w1, b1, w2, b2)
    out = jax.block_until_ready(out)
    assert out.shape == (B, dim4)

    # Reference #1: same bf16-operand / f32-accumulate math as the kernel.
    xc = jnp.concatenate([x1, x2], axis=1).astype(jnp.bfloat16)
    h_bf = jnp.maximum(
        jnp.dot(xc, w1.astype(jnp.bfloat16), preferred_element_type=jnp.float32) + b1,
        0.0)
    ref_bf = jnp.dot(h_bf.astype(jnp.bfloat16), w2.astype(jnp.bfloat16),
                     preferred_element_type=jnp.float32) + b2
    assert jnp.allclose(out, ref_bf, atol=2e-3, rtol=2e-3)

    # Reference #2: pure-f32 PyTorch-equivalent forward (loose tol, bf16 operands).
    x_f32 = jnp.concatenate([x1, x2], axis=1)
    ref_f32 = jnp.maximum(x_f32 @ w1 + b1, 0.0) @ w2 + b2
    assert jnp.allclose(out, ref_f32, atol=5e-2, rtol=5e-2)

    print("KERNEL_OK")
</pallas_src>

<mosaic_0001>
module attributes {stable_mosaic.version = 11 : i64} {
  func.func @merge_layer_kernel(%arg0: i32, %arg1: memref<8x16xf32, #tpu.memory_space<vmem>>, %arg2: memref<8x16xf32, #tpu.memory_space<vmem>>, %arg3: memref<16x32xbf16, #tpu.memory_space<vmem>>, %arg4: memref<16x32xbf16, #tpu.memory_space<vmem>>, %arg5: memref<1x32xf32, #tpu.memory_space<vmem>>, %arg6: memref<8x32xbf16, #tpu.memory_space<vmem>>, %arg7: memref<8x1xf32, #tpu.memory_space<vmem>>, %arg8: memref<8x8xf32, #tpu.memory_space<vmem>>) attributes {dimension_semantics = [#tpu.dimension_semantics<parallel>], iteration_bounds = array<i64: 1>, scalar_prefetch = 0 : i64, scratch_operands = 0 : i64, tpu.core_type = #tpu.core_type<tc>, window_params = [{transform_indices = @transform_0, window_bounds = array<i64: 8, 16>}, {transform_indices = @transform_1, window_bounds = array<i64: 8, 16>}, {pipeline_mode = #tpu.pipeline_mode<synchronous>, transform_indices = @transform_2, window_bounds = array<i64: 16, 32>}, {pipeline_mode = #tpu.pipeline_mode<synchronous>, transform_indices = @transform_3, window_bounds = array<i64: 16, 32>}, {pipeline_mode = #tpu.pipeline_mode<synchronous>, transform_indices = @transform_4, window_bounds = array<i64: 1, 32>}, {pipeline_mode = #tpu.pipeline_mode<synchronous>, transform_indices = @transform_5, window_bounds = array<i64: 8, 32>}, {pipeline_mode = #tpu.pipeline_mode<synchronous>, transform_indices = @transform_6, window_bounds = array<i64: 8, 1>}, {transform_indices = @transform_7, window_bounds = array<i64: 8, 8>}]} {
    %c0 = arith.constant 0 : index
    %c0_0 = arith.constant 0 : index
    %0 = vector.load %arg1[%c0, %c0_0] : memref<8x16xf32, #tpu.memory_space<vmem>>, vector<8x16xf32>
    %1 = arith.truncf %0 : vector<8x16xf32> to vector<8x16xbf16>
    %c0_1 = arith.constant 0 : index
    %c0_2 = arith.constant 0 : index
    %2 = vector.load %arg3[%c0_1, %c0_2] : memref<16x32xbf16, #tpu.memory_space<vmem>>, vector<16x32xbf16>
    %cst = arith.constant dense<0.000000e+00> : vector<8x32xf32>
    %3 = tpu.matmul %1, %2, %cst {dimension_numbers = #tpu.dot_dimension_numbers<[1], [0], [0], [1], [0, 0, 1, 1], [], []>} : vector<8x16xbf16>, vector<16x32xbf16>, vector<8x32xf32> -> vector<8x32xf32>
    %c0_3 = arith.constant 0 : index
    %c0_4 = arith.constant 0 : index
    %4 = vector.load %arg2[%c0_3, %c0_4] : memref<8x16xf32, #tpu.memory_space<vmem>>, vector<8x16xf32>
    %5 = arith.truncf %4 : vector<8x16xf32> to vector<8x16xbf16>
    %c0_5 = arith.constant 0 : index
    %c0_6 = arith.constant 0 : index
    %6 = vector.load %arg4[%c0_5, %c0_6] : memref<16x32xbf16, #tpu.memory_space<vmem>>, vector<16x32xbf16>
    %cst_7 = arith.constant dense<0.000000e+00> : vector<8x32xf32>
    %7 = tpu.matmul %5, %6, %cst_7 {dimension_numbers = #tpu.dot_dimension_numbers<[1], [0], [0], [1], [0, 0, 1, 1], [], []>} : vector<8x16xbf16>, vector<16x32xbf16>, vector<8x32xf32> -> vector<8x32xf32>
    %8 = arith.addf %3, %7 : vector<8x32xf32>
    %c0_8 = arith.constant 0 : index
    %c0_9 = arith.constant 0 : index
    %9 = vector.load %arg5[%c0_8, %c0_9] : memref<1x32xf32, #tpu.memory_space<vmem>>, vector<1x32xf32>
    %10 = vector.broadcast %9 : vector<1x32xf32> to vector<8x32xf32>
    %11 = arith.addf %8, %10 : vector<8x32xf32>
    %cst_10 = arith.constant 0.000000e+00 : f32
    %12 = vector.broadcast %cst_10 : f32 to vector<8x32xf32>
    %13 = arith.maximumf %11, %12 : vector<8x32xf32>
    %c0_11 = arith.constant 0 : index
    %c0_12 = arith.constant 0 : index
    %14 = vector.load %arg6[%c0_11, %c0_12] : memref<8x32xbf16, #tpu.memory_space<vmem>>, vector<8x32xbf16>
    %15 = arith.truncf %13 : vector<8x32xf32> to vector<8x32xbf16>
    %cst_13 = arith.constant dense<0.000000e+00> : vector<8x8xf32>
    %16 = tpu.matmul %14, %15, %cst_13 {dimension_numbers = #tpu.dot_dimension_numbers<[1], [1], [0], [0], [0, 0, 1, 0], [], []>} : vector<8x32xbf16>, vector<8x32xbf16>, vector<8x8xf32> -> vector<8x8xf32>
    %c0_14 = arith.constant 0 : index
    %c0_15 = arith.constant 0 : index
    %17 = vector.load %arg7[%c0_14, %c0_15] : memref<8x1xf32, #tpu.memory_space<vmem>>, vector<8x1xf32>
    %18 = vector.broadcast %17 : vector<8x1xf32> to vector<8x8xf32>
    %19 = arith.addf %16, %18 : vector<8x8xf32>
    %c0_16 = arith.constant 0 : index
    %c0_17 = arith.constant 0 : index
    %20 = vector.load %arg8[%c0_16, %c0_17] : memref<8x8xf32, #tpu.memory_space<vmem>>, vector<8x8xf32>
    tpu.vector_store %arg8[%c0_16, %c0_17], %19 {strides = array<i32>} : memref<8x8xf32, #tpu.memory_space<vmem>>, vector<8x8xf32>,
    return
  }
  func.func @transform_0(%arg0: i32) -> (i32, i32) {
    %c0_i32 = arith.constant 0 : i32
    %c0_i32_0 = arith.constant 0 : i32
    return %arg0, %c0_i32 : i32, i32
  }
  func.func @transform_1(%arg0: i32) -> (i32, i32) {
    %c0_i32 = arith.constant 0 : i32
    %c0_i32_0 = arith.constant 0 : i32
    return %arg0, %c0_i32 : i32, i32
  }
  func.func @transform_2(%arg0: i32) -> (i32, i32) {
    %c0_i32 = arith.constant 0 : i32
    %c0_i32_0 = arith.constant 0 : i32
    %c0_i32_1 = arith.constant 0 : i32
    return %c0_i32, %c0_i32_0 : i32, i32
  }
  func.func @transform_3(%arg0: i32) -> (i32, i32) {
    %c0_i32 = arith.constant 0 : i32
    %c0_i32_0 = arith.constant 0 : i32
    %c0_i32_1 = arith.constant 0 : i32
    return %c0_i32, %c0_i32_0 : i32, i32
  }
  func.func @transform_4(%arg0: i32) -> (i32, i32) {
    %c0_i32 = arith.constant 0 : i32
    %c0_i32_0 = arith.constant 0 : i32
    %c0_i32_1 = arith.constant 0 : i32
    return %c0_i32, %c0_i32_0 : i32, i32
  }
  func.func @transform_5(%arg0: i32) -> (i32, i32) {
    %c0_i32 = arith.constant 0 : i32
    %c0_i32_0 = arith.constant 0 : i32
    %c0_i32_1 = arith.constant 0 : i32
    return %c0_i32, %c0_i32_0 : i32, i32
  }
  func.func @transform_6(%arg0: i32) -> (i32, i32) {
    %c0_i32 = arith.constant 0 : i32
    %c0_i32_0 = arith.constant 0 : i32
    %c0_i32_1 = arith.constant 0 : i32
    return %c0_i32, %c0_i32_0 : i32, i32
  }
  func.func @transform_7(%arg0: i32) -> (i32, i32) {
    %c0_i32 = arith.constant 0 : i32
    %c0_i32_0 = arith.constant 0 : i32
    return %c0_i32, %arg0 : i32, i32
  }
}

</mosaic_0001>

<llo_original>
// kernel: tpu_custom_call.1
$region0: #{tpu_custom_call.1}
  #allocation0 [shape = 'u32[]', space=smem, size = 0x4, offset = 0x4, fixed_abs, tag = 'smem constant byte address 0x4 - core index']
  #allocation1 [shape = 'u32[72,128]{1,0:T(1,128)}', space=vmem, size = 0x9000, scoped, tag = 'internal scratch']
  %s0 = inlined_call_operand.vmem [shape: f32[8,16], index: 0, kind: input, shape index: {}]
  %s1 = inlined_call_operand.hbm [shape: f32[8,16], index: 1, kind: input, shape index: {}]
  %s2 = inlined_call_operand.hbm [shape: bf16[16,32], index: 2, kind: input, shape index: {}]
  %s3 = inlined_call_operand.hbm [shape: bf16[16,32], index: 3, kind: input, shape index: {}]
  %s4 = inlined_call_operand.vmem [shape: f32[1,32], index: 4, kind: input, shape index: {}]
  %s5 = inlined_call_operand.hbm [shape: bf16[8,32], index: 5, kind: input, shape index: {}]
  %s6 = inlined_call_operand.vmem [shape: f32[8,1], index: 6, kind: input, shape index: {}]
  %s7 = inlined_call_operand.hbm [shape: f32[8,8], index: 7, kind: output, shape index: {}]
  %s8 = sld [smem:[#allocation0]]
  $region54: #{tpu_custom_call.1} parent=0
    _
  %s10 = ssub.s32 1, %s8
  %s11 = scalar_select 0, %s10, %s8
  $region1: #{tpu_custom_call.1} parent=0
    #allocation2 [shape = 'u8[4096]{0}', space=vmem, size = 0x1000, scoped, tag = 'input window, operand 1, single buffered']
    #allocation3 [shape = 's32[1]{0}', space=sflag, size = 0x4, scoped, tag = 'scoped memory for tpu_custom_call.1']
    #allocation4 [shape = 's32[1]{0}', space=sflag, size = 0x4, scoped, tag = 'scoped memory for tpu_custom_call.1']
    #allocation5 [shape = 'u8[4096]{0}', space=vmem, size = 0x1000, scoped, tag = 'input window, operand 2, single buffered']
    #allocation6 [shape = 's32[1]{0}', space=sflag, size = 0x4, scoped, tag = 'scoped memory for tpu_custom_call.1']
    #allocation7 [shape = 'u8[4096]{0}', space=vmem, size = 0x1000, scoped, tag = 'input window, operand 3, single buffered']
    #allocation8 [shape = 'u8[2048]{0}', space=vmem, size = 0x800, scoped, tag = 'input window, operand 5, single buffered']
    #allocation9 [shape = 's32[1]{0}', space=sflag, size = 0x4, scoped, tag = 'scoped memory for tpu_custom_call.1']
    #allocation10 [shape = 'u8[4096]{0}', space=vmem, size = 0x1000, scoped, tag = 'output window, operand 0, single buffered']
    %12 = vsyncpa [#allocation3], 0
    %13 = vsyncpa [#allocation6], 0
    %14 = vsyncpa [#allocation9], 0
    %15 = vsyncpa [#allocation4], 0
    // Predicated region
    $region2: #{tpu_custom_call.1} parent=1 // pred_check
      _
    $region3: #{tpu_custom_call.1} parent=1 // pred_check_branch
      %17 = sbr.rel (0) target = $region5
    $region4: #{tpu_custom_call.1} parent=1 // pred_region
      _
    $region5: #{tpu_custom_call.1} parent=1 // pred_fallthru
      _
    // Predicated region
    $region6: #{tpu_custom_call.1} parent=1 // pred_check
      _
    $region7: #{tpu_custom_call.1} parent=1 // pred_check_branch
      %19 = sbr.rel (0) target = $region9
    $region8: #{tpu_custom_call.1} parent=1 // pred_region
      %21 = vsyncadd [#allocation3], 0
      %s23 = sshll.u32 %s1, 4
      %s24 = int_to_ptr.hbm [resolvable:$true] %s23
      %s25 = sshll.u32 [#allocation2], 4
      %s26 = int_to_ptr.vmem [resolvable:$true] %s25
      %28 = dma.hbm_to_vmem [thread:$0]  %s24, 128, %s26, [#allocation3]
    $region9: #{tpu_custom_call.1} parent=1 // pred_fallthru
      _
    // Predicated region
    $region10: #{tpu_custom_call.1} parent=1 // pred_check
      _
    $region11: #{tpu_custom_call.1} parent=1 // pred_check_branch
      %30 = sbr.rel (0) target = $region13
    $region12: #{tpu_custom_call.1} parent=1 // pred_region
      %32 = vsyncadd [#allocation6], 0
      %s33 = sshll.u32 %s2, 4
      %s34 = int_to_ptr.hbm [resolvable:$true] %s33
      %s35 = sshll.u32 [#allocation5], 4
      %s36 = int_to_ptr.vmem [resolvable:$true] %s35
      %41 = dma.hbm_to_vmem [thread:$0]  %s34, 128, %s36, [#allocation6], 64, 64, 4
    $region13: #{tpu_custom_call.1} parent=1 // pred_fallthru
      _
    // Predicated region
    $region14: #{tpu_custom_call.1} parent=1 // pred_check
      _
    $region15: #{tpu_custom_call.1} parent=1 // pred_check_branch
      %43 = sbr.rel (0) target = $region17
    $region16: #{tpu_custom_call.1} parent=1 // pred_region
      %45 = vsyncadd [#allocation6], 0
      %s46 = sshll.u32 %s3, 4
      %s47 = int_to_ptr.hbm [resolvable:$true] %s46
      %s48 = sshll.u32 [#allocation7], 4
      %s49 = int_to_ptr.vmem [resolvable:$true] %s48
      %54 = dma.hbm_to_vmem [thread:$0]  %s47, 128, %s49, [#allocation6], 64, 64, 4
    $region17: #{tpu_custom_call.1} parent=1 // pred_fallthru
      _
    // Predicated region
    $region18: #{tpu_custom_call.1} parent=1 // pred_check
      _
    $region19: #{tpu_custom_call.1} parent=1 // pred_check_branch
      %56 = sbr.rel (0) target = $region21
    $region20: #{tpu_custom_call.1} parent=1 // pred_region
      _
    $region21: #{tpu_custom_call.1} parent=1 // pred_fallthru
      _
    // Predicated region
    $region22: #{tpu_custom_call.1} parent=1 // pred_check
      _
    $region23: #{tpu_custom_call.1} parent=1 // pred_check_branch
      %58 = sbr.rel (0) target = $region25
    $region24: #{tpu_custom_call.1} parent=1 // pred_region
      %60 = vsyncadd [#allocation9], 0
      %s62 = sshll.u32 %s5, 4
      %s63 = int_to_ptr.hbm [resolvable:$true] %s62
      %s64 = sshll.u32 [#allocation8], 4
      %s65 = int_to_ptr.vmem [resolvable:$true] %s64
      %67 = dma.hbm_to_vmem [thread:$0]  %s63, 64, %s65, [#allocation9]
    $region25: #{tpu_custom_call.1} parent=1 // pred_fallthru
      _
    // Predicated region
    $region26: #{tpu_custom_call.1} parent=1 // pred_check
      _
    $region27: #{tpu_custom_call.1} parent=1 // pred_check_branch
      %69 = sbr.rel (0) target = $region29
    $region28: #{tpu_custom_call.1} parent=1 // pred_region
      _
    $region29: #{tpu_custom_call.1} parent=1 // pred_fallthru
      _
    // Predicated region
    $region30: #{tpu_custom_call.1} parent=1 // pred_check
      _
    $region31: #{tpu_custom_call.1} parent=1 // pred_check_branch
      %71 = sbr.rel (0) target = $region33
    $region32: #{tpu_custom_call.1} parent=1 // pred_region
      %73 = dma.done [#allocation3], 128
    $region33: #{tpu_custom_call.1} parent=1 // pred_fallthru
      _
    // Predicated region
    $region34: #{tpu_custom_call.1} parent=1 // pred_check
      _
    $region35: #{tpu_custom_call.1} parent=1 // pred_check_branch
      %75 = sbr.rel (0) target = $region37
    $region36: #{tpu_custom_call.1} parent=1 // pred_region
      %77 = dma.done [#allocation6], 128
    $region37: #{tpu_custom_call.1} parent=1 // pred_fallthru
      _
    // Predicated region
    $region38: #{tpu_custom_call.1} parent=1 // pred_check
      _
    $region39: #{tpu_custom_call.1} parent=1 // pred_check_branch
      %79 = sbr.rel (0) target = $region41
    $region40: #{tpu_custom_call.1} parent=1 // pred_region
      %81 = dma.done [#allocation6], 128
    $region41: #{tpu_custom_call.1} parent=1 // pred_fallthru
      _
    // Predicated region
    $region42: #{tpu_custom_call.1} parent=1 // pred_check
      _
    $region43: #{tpu_custom_call.1} parent=1 // pred_check_branch
      %83 = sbr.rel (0) target = $region45
    $region44: #{tpu_custom_call.1} parent=1 // pred_region
      %85 = dma.done [#allocation9], 64
    $region45: #{tpu_custom_call.1} parent=1 // pred_fallthru
      _
    %v87 = vld [vmem:[%s0] sm:$0xff]
    %v88 = vpack.c.bf16 %v87, %v87
    %v89 = vld [vmem:[#allocation5] sm:$0xf]
    %v90 = vld [vmem:[#allocation5 + $0x4] sm:$0xf]
    %v91 = vld [vmem:[#allocation2] sm:$0xff]
    %v92 = vpack.c.bf16 %v91, %v91
    %v93 = vld [vmem:[#allocation7] sm:$0xf]
    %v94 = vld [vmem:[#allocation7 + $0x4] sm:$0xf]
    %v97 = vunpack.c.l.b16 %v93
    %v98 = vunpack.c.l.b16 %v94
    %v99 = vpack.c.b16 %v98, %v97
    %vm101 = vcmask 130048
    %v103 = vsel %vm101, %v92, 0
    %105 = vmatpush.bf16.msra.mxu0 0
    %106 = vmatpush.bf16.msra.mxu0 0
    %107 = vmatpush.bf16.msra.mxu0 0
    %108 = vmatpush.bf16.msra.mxu0 0
    %109 = vmatpush.bf16.msra.mxu0 0
    %110 = vmatpush.bf16.msra.mxu0 0
    %111 = vmatpush.bf16.msra.mxu0 0
    %112 = vmatpush.bf16.msra.mxu0 %v99
    %113 = vmatmul.bf16.gmra.mxu0 %v103
    %v114 = vpop.f32.mrf.mxu0
    %v115 = vadd.f32 0.0, %v114
    %v116 = vpop.f32.mrf.mxu0
    %117 = vdwg.mxu0
    %v120 = vunpack.c.l.b16 %v89
    %v121 = vunpack.c.l.b16 %v90
    %v122 = vpack.c.b16 %v121, %v120
    %v125 = vsel %vm101, %v88, 0
    %127 = vmatpush.bf16.msra.mxu0 0
    %128 = vmatpush.bf16.msra.mxu0 0
    %129 = vmatpush.bf16.msra.mxu0 0
    %130 = vmatpush.bf16.msra.mxu0 0
    %131 = vmatpush.bf16.msra.mxu0 0
    %132 = vmatpush.bf16.msra.mxu0 0
    %133 = vmatpush.bf16.msra.mxu0 0
    %134 = vmatpush.bf16.msra.mxu0 %v122
    %135 = vmatmul.bf16.gmra.mxu0 %v125
    %v136 = vpop.f32.mrf.mxu0
    %v137 = vadd.f32 %v115, %v136
    %v138 = vpop.f32.mrf.mxu0
    %139 = vdwg.mxu0
    %v140 = vld [vmem:[%s4] sm:$0x1]
    %v142 = vperm.slane %v140, 0
    %v144 = vadd.f32 %v137, %v142
    %v145 = vmax.f32 %v144, 0.0
    %v146 = vld [vmem:[#allocation8] sm:$0xf]
    %v147 = vpack.c.bf16 %v145, %v145
    %v148 = vld [vmem:[%s6] sm:$0xff]
    %150 = vset.pattern.permute.xlu0 0
    %151 = vperm.xlu0 %150, %v148
    %v152 = vpop.permute.xlu0 %151
    %vm154 = vcmask 261120
    %v156 = vsel %vm154, %v146, 0
    %v159 = vsel %vm154, %v147, 0
    %161 = vmatpush.bf16.xpose.msra.mxu0 0
    %162 = vmatpush.bf16.xpose.msra.mxu0 0
    %163 = vmatpush.bf16.xpose.msra.mxu0 0
    %164 = vmatpush.bf16.xpose.msra.mxu0 0
    %165 = vmatpush.bf16.xpose.msra.mxu0 0
    %166 = vmatpush.bf16.xpose.msra.mxu0 0
    %167 = vmatpush.bf16.xpose.msra.mxu0 0
    %168 = vmatpush.bf16.xpose.msra.mxu0 %v159
    %169 = vmatmul.bf16.gmra.mxu0 %v156
    %v170 = vpop.f32.mrf.mxu0
    %v171 = vadd.f32 %v152, %v170
    %v172 = vpop.f32.mrf.mxu0
    %173 = vdwg.mxu0
    %vm174 = vcmask 64512
    %175 = vst.msk [vmem:[#allocation10] sm:$0xff] %vm174, %v171
    // Predicated region
    $region46: #{tpu_custom_call.1} parent=1 // pred_check
      _
    $region47: #{tpu_custom_call.1} parent=1 // pred_check_branch
      %177 = sbr.rel (0) target = $region49
    $region48: #{tpu_custom_call.1} parent=1 // pred_region
      %179 = vsyncadd [#allocation4], 0
      %s181 = sshll.u32 [#allocation10], 4
      %s182 = int_to_ptr.vmem [resolvable:$true] %s181
      %s183 = sshll.u32 %s7, 4
      %s184 = int_to_ptr.hbm [resolvable:$true] %s183
      %186 = dma.vmem_to_hbm [thread:$0]  %s182, 128, %s184, [#allocation4]
    $region49: #{tpu_custom_call.1} parent=1 // pred_fallthru
      _
    // Predicated region
    $region50: #{tpu_custom_call.1} parent=1 // pred_check
      _
    $region51: #{tpu_custom_call.1} parent=1 // pred_check_branch
      %188 = sbr.rel (0) target = $region53
    $region52: #{tpu_custom_call.1} parent=1 // pred_region
      %190 = dma.done [#allocation4], 128
    $region53: #{tpu_custom_call.1} parent=1 // pred_fallthru
      _
    %191 = vsyncpa [#allocation3], 1
    %192 = vsyncpa [#allocation6], 1
    %193 = vsyncpa [#allocation9], 1
    %194 = vsyncpa [#allocation4], 1

</llo_original>
